<compile_context>
chip_gen: v6e
topology: v6e:2x2x1
jax: 0.10.0
libtpu: 0.0.40
codegen_flags: <defaults>
</compile_context>

<pallas_src>
import math

import jax
import jax.numpy as jnp
from jax.experimental import pallas as pl
from jax.experimental.pallas import tpu as pltpu


def make_pinn_kernel(n_layers, K, fourier_feat_input, fourier_feat_g,
                     use_bf16_transcendentals=False):
    """Build the Pallas kernel body for a static configuration."""

    def transcendental(fn, v):
        if use_bf16_transcendentals:
            # v6e/v7x only: EUP bf16 path ~2x f32 throughput.  Off by default.
            return fn(v.astype(jnp.bfloat16)).astype(jnp.float32)
        return fn(v)

    def kernel(*refs):
        idx = 0
        x_ref = refs[idx]; idx += 1                       # (1, TILE_N)
        if fourier_feat_input:
            ks2_pi_ref = refs[idx]; idx += 1              # (2K, 1)  pi*[ks, ks]
            phase_ref = refs[idx]; idx += 1               # (2K, 1)  [0.., pi/2..]
        elif fourier_feat_g:
            ks_pi_ref = refs[idx]; idx += 1               # (K, 1)   pi*ks
        w_refs = refs[idx:idx + n_layers]; idx += n_layers
        b_refs = refs[idx:idx + n_layers]; idx += n_layers
        o_ref = refs[idx]                                 # (1, TILE_N)

        x = x_ref[...]                                    # (1, TILE_N) f32

        g = None
        if fourier_feat_input:
            # Fused sin/cos: one transcendental over (2K, TILE_N), no concat.
            ff = transcendental(jnp.sin, ks2_pi_ref[...] * x + phase_ref[...])
            z = ff                                        # (2K, TILE_N)
            if fourier_feat_g:
                g = ff[:K, :]                             # == sin(pi*ks*x), free
        else:
            z = x
            if fourier_feat_g:
                g = transcendental(jnp.sin, ks_pi_ref[...] * x)   # (K, TILE_N)

        # MLP hot path (feature-major): z <- tanh(W @ z + b), last layer linear.
        for i in range(n_layers):
            z = jnp.dot(w_refs[i][...], z,
                        preferred_element_type=jnp.float32) + b_refs[i][...]
            if i < n_layers - 1:
                z = transcendental(jnp.tanh, z)

        if fourier_feat_g:
            # mean over features == sum of (z/K)*g ; the 1/K is folded into the
            # last layer's W/b in the wrapper, so just sum K sublane slices.
            zg = z * g                                    # (K, TILE_N)
            acc = zg[0:1, :]
            for r in range(1, K):
                acc = acc + zg[r:r + 1, :]
            o_ref[...] = acc                              # (1, TILE_N) lane-dense
        else:
            o_ref[...] = z * x * (1.0 - x)                # (1, TILE_N)

    return kernel


def pinn_forward(x, ks, weights, biases, fourier_feat_input, fourier_feat_g,
                 *, tile_n=512, use_bf16_transcendentals=False):
    """PINN forward in one Pallas call, tiled over the batch dimension.

    x:       (N, 1) float32, PyTorch (batch, features) convention.
    ks:      (1, K) float32.
    weights: list of (out_i, in_i) float32 (PyTorch nn.Linear layout).
    biases:  list of (out_i,) float32.
    Returns (N, 1) float32.
    """
    n, in_dim = x.shape
    assert in_dim == 1, "kernel implements base_input_dim == 1 (as the module requires)"
    K = int(ks.shape[-1])
    n_layers = len(weights)

    # Pad batch to a multiple of tile_n; batch goes on the 128-lane axis.
    n_pad = max(tile_n, ((n + tile_n - 1) // tile_n) * tile_n)
    xt = jnp.zeros((1, n_pad), jnp.float32).at[0, :n].set(x[:, 0].astype(jnp.float32))

    pi = math.pi
    inputs = [xt]
    in_specs = [pl.BlockSpec((1, tile_n), lambda i: (0, i))]

    def add_resident(arr):
        # Full-array block, constant index_map -> stays resident in VMEM.
        inputs.append(arr)
        in_specs.append(pl.BlockSpec(arr.shape, lambda i: (0, 0)))

    if fourier_feat_input:
        ks_row = ks.reshape(-1).astype(jnp.float32)
        ks2_pi = (pi * jnp.concatenate([ks_row, ks_row])).reshape(2 * K, 1)
        phase = jnp.concatenate([
            jnp.zeros((K,), jnp.float32),
            jnp.full((K,), pi / 2.0, jnp.float32)]).reshape(2 * K, 1)
        add_resident(ks2_pi)
        add_resident(phase)
    elif fourier_feat_g:
        ks_pi = (pi * ks.reshape(-1).astype(jnp.float32)).reshape(K, 1)
        add_resident(ks_pi)

    w_list = [w.astype(jnp.float32) for w in weights]
    b_list = [b.reshape(-1, 1).astype(jnp.float32) for b in biases]
    if fourier_feat_g:
        # Fold the 1/K of the final mean into the last linear layer (exact).
        w_list[-1] = w_list[-1] / K
        b_list[-1] = b_list[-1] / K
    for w in w_list:
        add_resident(w)
    for b in b_list:
        add_resident(b)

    kernel = make_pinn_kernel(n_layers, K, fourier_feat_input, fourier_feat_g,
                              use_bf16_transcendentals)

    # Advisory cost estimate for XLA's scheduler.
    flops = 2 * n_pad * sum(int(w.shape[0] * w.shape[1]) for w in w_list)
    transcendentals = n_pad * ((2 * K if fourier_feat_input else 0)
                               + sum(int(w.shape[0]) for w in w_list[:-1])
                               + (K if (fourier_feat_g and not fourier_feat_input) else 0))
    bytes_accessed = int(xt.nbytes) + 4 * n_pad + sum(int(a.nbytes) for a in inputs[1:])

    out = pl.pallas_call(
        kernel,
        out_shape=jax.ShapeDtypeStruct((1, n_pad), jnp.float32),
        grid=(n_pad // tile_n,),
        in_specs=in_specs,
        out_specs=pl.BlockSpec((1, tile_n), lambda i: (0, i)),
        compiler_params=pltpu.CompilerParams(
            dimension_semantics=("parallel",)),
        cost_estimate=pl.CostEstimate(
            flops=flops,
            transcendentals=transcendentals,
            bytes_accessed=bytes_accessed),
    )(*inputs)

    return out[0, :n].reshape(n, 1)


def make_adjusted_layers(base_input_dim, layers, fact, ffi, ffg):
    K = fact + 1
    if ffi and ffg:
        return [2 * K * base_input_dim] + layers + [K]
    if ffi and not ffg:
        return [2 * K * base_input_dim] + layers + [1]
    if (not ffi) and ffg:
        return [1] + layers + [K]
    return [1] + layers + [1]


def init_params(key, adjusted_layers):
    """xavier_normal(gain=tanh) weights in PyTorch (out, in) layout, bias = 0.1."""
    gain = 5.0 / 3.0  # nn.init.calculate_gain('tanh')
    weights, biases = [], []
    for i in range(len(adjusted_layers) - 1):
        fan_in, fan_out = adjusted_layers[i], adjusted_layers[i + 1]
        key, sub = jax.random.split(key)
        std = gain * math.sqrt(2.0 / (fan_in + fan_out))
        w = std * jax.random.normal(sub, (fan_out, fan_in), dtype=jnp.float32)
        b = jnp.full((fan_out,), 0.1, dtype=jnp.float32)
        weights.append(w)
        biases.append(b)
    return weights, biases


def reference_forward(x, ks, weights, biases, ffi, ffg):
    """Pure-JAX reference mirroring the PyTorch forward exactly."""
    if ffi:
        arg = ks * jnp.float32(math.pi) * x
        z = jnp.concatenate([jnp.sin(arg), jnp.cos(arg)], axis=1)
    else:
        z = x
    for i in range(len(weights) - 1):
        z = jnp.tanh(z @ weights[i].T + biases[i])
    z = z @ weights[-1].T + biases[-1]
    if ffg:
        g = jnp.sin(ks * jnp.float32(math.pi) * x)
        z = jnp.mean(z * g, axis=1, keepdims=True)
    else:
        z = z * x * (1.0 - x)
    return z


if __name__ == "__main__":
    # Matches PINN(base_input_dim=1, layers=[32, 32], fact=3, ...)
    base_input_dim = 1
    layers = [32, 32]
    fact = 3
    K = fact + 1

    ks = (2.0 ** jnp.arange(0, K, dtype=jnp.float32)).reshape(1, K)  # self.ks

    key = jax.random.PRNGKey(0)
    key, xkey = jax.random.split(key)
    N = 8
    x = jax.random.uniform(xkey, (N, base_input_dim), dtype=jnp.float32)  # in [0, 1)

    # Exercise both output branches of the module.
    for ffi, ffg in [(True, True), (True, False)]:
        adjusted = make_adjusted_layers(base_input_dim, layers, fact, ffi, ffg)
        weights, biases = init_params(jax.random.PRNGKey(1), adjusted)

        out = pinn_forward(x, ks, weights, biases, ffi, ffg, tile_n=256)
        out = jax.block_until_ready(out)

        ref = reference_forward(x, ks, weights, biases, ffi, ffg)
        assert out.shape == (N, 1), out.shape
        # Tolerance allows the exact-math (but not bit-identical) cos->sin(+pi/2)
        # fusion inside the kernel.
        assert jnp.allclose(out, ref, atol=1e-4, rtol=1e-4), (ffi, ffg, out, ref)

    print("KERNEL_OK")
</pallas_src>

<mosaic_0001>
module attributes {stable_mosaic.version = 11 : i64} {
  func.func @kernel(%arg0: i32, %arg1: memref<1x256xf32, #tpu.memory_space<vmem>>, %arg2: memref<8x1xf32, #tpu.memory_space<vmem>>, %arg3: memref<8x1xf32, #tpu.memory_space<vmem>>, %arg4: memref<32x8xf32, #tpu.memory_space<vmem>>, %arg5: memref<32x32xf32, #tpu.memory_space<vmem>>, %arg6: memref<4x32xf32, #tpu.memory_space<vmem>>, %arg7: memref<32x1xf32, #tpu.memory_space<vmem>>, %arg8: memref<32x1xf32, #tpu.memory_space<vmem>>, %arg9: memref<4x1xf32, #tpu.memory_space<vmem>>, %arg10: memref<1x256xf32, #tpu.memory_space<vmem>>) attributes {dimension_semantics = [#tpu.dimension_semantics<parallel>], iteration_bounds = array<i64: 1>, scalar_prefetch = 0 : i64, scratch_operands = 0 : i64, tpu.core_type = #tpu.core_type<tc>, window_params = [{transform_indices = @transform_0, window_bounds = array<i64: 1, 256>}, {pipeline_mode = #tpu.pipeline_mode<synchronous>, transform_indices = @transform_1, window_bounds = array<i64: 8, 1>}, {pipeline_mode = #tpu.pipeline_mode<synchronous>, transform_indices = @transform_2, window_bounds = array<i64: 8, 1>}, {pipeline_mode = #tpu.pipeline_mode<synchronous>, transform_indices = @transform_3, window_bounds = array<i64: 32, 8>}, {pipeline_mode = #tpu.pipeline_mode<synchronous>, transform_indices = @transform_4, window_bounds = array<i64: 32, 32>}, {pipeline_mode = #tpu.pipeline_mode<synchronous>, transform_indices = @transform_5, window_bounds = array<i64: 4, 32>}, {pipeline_mode = #tpu.pipeline_mode<synchronous>, transform_indices = @transform_6, window_bounds = array<i64: 32, 1>}, {pipeline_mode = #tpu.pipeline_mode<synchronous>, transform_indices = @transform_7, window_bounds = array<i64: 32, 1>}, {pipeline_mode = #tpu.pipeline_mode<synchronous>, transform_indices = @transform_8, window_bounds = array<i64: 4, 1>}, {transform_indices = @transform_9, window_bounds = array<i64: 1, 256>}]} {
    %c0 = arith.constant 0 : index
    %c0_0 = arith.constant 0 : index
    %0 = vector.load %arg1[%c0, %c0_0] : memref<1x256xf32, #tpu.memory_space<vmem>>, vector<1x256xf32>
    %c0_1 = arith.constant 0 : index
    %c0_2 = arith.constant 0 : index
    %1 = vector.load %arg2[%c0_1, %c0_2] : memref<8x1xf32, #tpu.memory_space<vmem>>, vector<8x1xf32>
    %2 = vector.broadcast %1 : vector<8x1xf32> to vector<8x256xf32>
    %3 = vector.broadcast %0 : vector<1x256xf32> to vector<8x256xf32>
    %4 = arith.mulf %2, %3 : vector<8x256xf32>
    %c0_3 = arith.constant 0 : index
    %c0_4 = arith.constant 0 : index
    %5 = vector.load %arg3[%c0_3, %c0_4] : memref<8x1xf32, #tpu.memory_space<vmem>>, vector<8x1xf32>
    %6 = vector.broadcast %5 : vector<8x1xf32> to vector<8x256xf32>
    %7 = arith.addf %4, %6 : vector<8x256xf32>
    %8 = math.sin %7 : vector<8x256xf32>
    %9 = vector.extract_strided_slice %8 {offsets = [0, 0], sizes = [4, 256], strides = [1, 1]} : vector<8x256xf32> to vector<4x256xf32>
    %c0_5 = arith.constant 0 : index
    %c0_6 = arith.constant 0 : index
    %10 = vector.load %arg4[%c0_5, %c0_6] : memref<32x8xf32, #tpu.memory_space<vmem>>, vector<32x8xf32>
    %cst = arith.constant dense<0.000000e+00> : vector<32x256xf32>
    %11 = tpu.matmul %10, %8, %cst {dimension_numbers = #tpu.dot_dimension_numbers<[1], [0], [0], [1], [0, 0, 1, 1], [], []>} : vector<32x8xf32>, vector<8x256xf32>, vector<32x256xf32> -> vector<32x256xf32>
    %c0_7 = arith.constant 0 : index
    %c0_8 = arith.constant 0 : index
    %12 = vector.load %arg7[%c0_7, %c0_8] : memref<32x1xf32, #tpu.memory_space<vmem>>, vector<32x1xf32>
    %13 = vector.broadcast %12 : vector<32x1xf32> to vector<32x256xf32>
    %14 = arith.addf %11, %13 : vector<32x256xf32>
    %15 = math.tanh %14 : vector<32x256xf32>
    %c0_9 = arith.constant 0 : index
    %c0_10 = arith.constant 0 : index
    %16 = vector.load %arg5[%c0_9, %c0_10] : memref<32x32xf32, #tpu.memory_space<vmem>>, vector<32x32xf32>
    %cst_11 = arith.constant dense<0.000000e+00> : vector<32x256xf32>
    %17 = tpu.matmul %16, %15, %cst_11 {dimension_numbers = #tpu.dot_dimension_numbers<[1], [0], [0], [1], [0, 0, 1, 1], [], []>} : vector<32x32xf32>, vector<32x256xf32>, vector<32x256xf32> -> vector<32x256xf32>
    %c0_12 = arith.constant 0 : index
    %c0_13 = arith.constant 0 : index
    %18 = vector.load %arg8[%c0_12, %c0_13] : memref<32x1xf32, #tpu.memory_space<vmem>>, vector<32x1xf32>
    %19 = vector.broadcast %18 : vector<32x1xf32> to vector<32x256xf32>
    %20 = arith.addf %17, %19 : vector<32x256xf32>
    %21 = math.tanh %20 : vector<32x256xf32>
    %c0_14 = arith.constant 0 : index
    %c0_15 = arith.constant 0 : index
    %22 = vector.load %arg6[%c0_14, %c0_15] : memref<4x32xf32, #tpu.memory_space<vmem>>, vector<4x32xf32>
    %cst_16 = arith.constant dense<0.000000e+00> : vector<4x256xf32>
    %23 = tpu.matmul %22, %21, %cst_16 {dimension_numbers = #tpu.dot_dimension_numbers<[1], [0], [0], [1], [0, 0, 1, 1], [], []>} : vector<4x32xf32>, vector<32x256xf32>, vector<4x256xf32> -> vector<4x256xf32>
    %c0_17 = arith.constant 0 : index
    %c0_18 = arith.constant 0 : index
    %24 = vector.load %arg9[%c0_17, %c0_18] : memref<4x1xf32, #tpu.memory_space<vmem>>, vector<4x1xf32>
    %25 = vector.broadcast %24 : vector<4x1xf32> to vector<4x256xf32>
    %26 = arith.addf %23, %25 : vector<4x256xf32>
    %27 = arith.mulf %26, %9 : vector<4x256xf32>
    %28 = vector.extract_strided_slice %27 {offsets = [0, 0], sizes = [1, 256], strides = [1, 1]} : vector<4x256xf32> to vector<1x256xf32>
    %29 = vector.extract_strided_slice %27 {offsets = [1, 0], sizes = [1, 256], strides = [1, 1]} : vector<4x256xf32> to vector<1x256xf32>
    %30 = arith.addf %28, %29 : vector<1x256xf32>
    %31 = vector.extract_strided_slice %27 {offsets = [2, 0], sizes = [1, 256], strides = [1, 1]} : vector<4x256xf32> to vector<1x256xf32>
    %32 = arith.addf %30, %31 : vector<1x256xf32>
    %33 = vector.extract_strided_slice %27 {offsets = [3, 0], sizes = [1, 256], strides = [1, 1]} : vector<4x256xf32> to vector<1x256xf32>
    %34 = arith.addf %32, %33 : vector<1x256xf32>
    %c0_19 = arith.constant 0 : index
    %c0_20 = arith.constant 0 : index
    %35 = vector.load %arg10[%c0_19, %c0_20] : memref<1x256xf32, #tpu.memory_space<vmem>>, vector<1x256xf32>
    tpu.vector_store %arg10[%c0_19, %c0_20], %34 {strides = array<i32>} : memref<1x256xf32, #tpu.memory_space<vmem>>, vector<1x256xf32>,
    return
  }
  func.func @transform_0(%arg0: i32) -> (i32, i32) {
    %c0_i32 = arith.constant 0 : i32
    %c0_i32_0 = arith.constant 0 : i32
    return %c0_i32, %arg0 : i32, i32
  }
  func.func @transform_1(%arg0: i32) -> (i32, i32) {
    %c0_i32 = arith.constant 0 : i32
    %c0_i32_0 = arith.constant 0 : i32
    %c0_i32_1 = arith.constant 0 : i32
    return %c0_i32, %c0_i32_0 : i32, i32
  }
  func.func @transform_2(%arg0: i32) -> (i32, i32) {
    %c0_i32 = arith.constant 0 : i32
    %c0_i32_0 = arith.constant 0 : i32
    %c0_i32_1 = arith.constant 0 : i32
    return %c0_i32, %c0_i32_0 : i32, i32
  }
  func.func @transform_3(%arg0: i32) -> (i32, i32) {
    %c0_i32 = arith.constant 0 : i32
    %c0_i32_0 = arith.constant 0 : i32
    %c0_i32_1 = arith.constant 0 : i32
    return %c0_i32, %c0_i32_0 : i32, i32
  }
  func.func @transform_4(%arg0: i32) -> (i32, i32) {
    %c0_i32 = arith.constant 0 : i32
    %c0_i32_0 = arith.constant 0 : i32
    %c0_i32_1 = arith.constant 0 : i32
    return %c0_i32, %c0_i32_0 : i32, i32
  }
  func.func @transform_5(%arg0: i32) -> (i32, i32) {
    %c0_i32 = arith.constant 0 : i32
    %c0_i32_0 = arith.constant 0 : i32
    %c0_i32_1 = arith.constant 0 : i32
    return %c0_i32, %c0_i32_0 : i32, i32
  }
  func.func @transform_6(%arg0: i32) -> (i32, i32) {
    %c0_i32 = arith.constant 0 : i32
    %c0_i32_0 = arith.constant 0 : i32
    %c0_i32_1 = arith.constant 0 : i32
    return %c0_i32, %c0_i32_0 : i32, i32
  }
  func.func @transform_7(%arg0: i32) -> (i32, i32) {
    %c0_i32 = arith.constant 0 : i32
    %c0_i32_0 = arith.constant 0 : i32
    %c0_i32_1 = arith.constant 0 : i32
    return %c0_i32, %c0_i32_0 : i32, i32
  }
  func.func @transform_8(%arg0: i32) -> (i32, i32) {
    %c0_i32 = arith.constant 0 : i32
    %c0_i32_0 = arith.constant 0 : i32
    %c0_i32_1 = arith.constant 0 : i32
    return %c0_i32, %c0_i32_0 : i32, i32
  }
  func.func @transform_9(%arg0: i32) -> (i32, i32) {
    %c0_i32 = arith.constant 0 : i32
    %c0_i32_0 = arith.constant 0 : i32
    return %c0_i32, %arg0 : i32, i32
  }
}

</mosaic_0001>

<llo_original>
// kernel: tpu_custom_call.1
$region0: #{tpu_custom_call.1}
  #allocation0 [shape = 'u32[]', space=smem, size = 0x4, offset = 0x4, fixed_abs, tag = 'smem constant byte address 0x4 - core index']
  #allocation1 [shape = 'u32[144,128]{1,0:T(1,128)}', space=vmem, size = 0x12000, scoped, tag = 'internal scratch']
  %s0 = inlined_call_operand.vmem [shape: f32[1,256], index: 0, kind: input, shape index: {}]
  %s1 = inlined_call_operand.vmem [shape: f32[8,1], index: 1, kind: input, shape index: {}]
  %s2 = inlined_call_operand.vmem [shape: f32[8,1], index: 2, kind: input, shape index: {}]
  %s3 = inlined_call_operand.vmem [shape: f32[32,8], index: 3, kind: input, shape index: {}]
  %s4 = inlined_call_operand.vmem [shape: f32[32,32], index: 4, kind: input, shape index: {}]
  %s5 = inlined_call_operand.vmem [shape: f32[4,32], index: 5, kind: input, shape index: {}]
  %s6 = inlined_call_operand.vmem [shape: f32[32,1], index: 6, kind: input, shape index: {}]
  %s7 = inlined_call_operand.vmem [shape: f32[32,1], index: 7, kind: input, shape index: {}]
  %s8 = inlined_call_operand.vmem [shape: f32[4,1], index: 8, kind: input, shape index: {}]
  %s9 = inlined_call_operand.hbm [shape: f32[1,256], index: 9, kind: output, shape index: {}]
  %s10 = sld [smem:[#allocation0]]
  $region46: #{tpu_custom_call.1} parent=0
    _
  %s12 = ssub.s32 1, %s10
  %s13 = scalar_select 0, %s12, %s10
  $region1: #{tpu_custom_call.1} parent=0
    #allocation2 [shape = 'u8[1024]{0}', space=vmem, size = 0x400, scoped, tag = 'output window, operand 0, single buffered']
    #allocation3 [shape = 's32[1]{0}', space=sflag, size = 0x4, scoped, tag = 'scoped memory for tpu_custom_call.1']
    %14 = vsyncpa [#allocation3], 0
    // Predicated region
    $region2: #{tpu_custom_call.1} parent=1 // pred_check
      _
    $region3: #{tpu_custom_call.1} parent=1 // pred_check_branch
      %16 = sbr.rel (0) target = $region5
    $region4: #{tpu_custom_call.1} parent=1 // pred_region
      _
    $region5: #{tpu_custom_call.1} parent=1 // pred_fallthru
      _
    // Predicated region
    $region6: #{tpu_custom_call.1} parent=1 // pred_check
      _
    $region7: #{tpu_custom_call.1} parent=1 // pred_check_branch
      %18 = sbr.rel (0) target = $region9
    $region8: #{tpu_custom_call.1} parent=1 // pred_region
      _
    $region9: #{tpu_custom_call.1} parent=1 // pred_fallthru
      _
    // Predicated region
    $region10: #{tpu_custom_call.1} parent=1 // pred_check
      _
    $region11: #{tpu_custom_call.1} parent=1 // pred_check_branch
      %20 = sbr.rel (0) target = $region13
    $region12: #{tpu_custom_call.1} parent=1 // pred_region
      _
    $region13: #{tpu_custom_call.1} parent=1 // pred_fallthru
      _
    // Predicated region
    $region14: #{tpu_custom_call.1} parent=1 // pred_check
      _
    $region15: #{tpu_custom_call.1} parent=1 // pred_check_branch
      %22 = sbr.rel (0) target = $region17
    $region16: #{tpu_custom_call.1} parent=1 // pred_region
      _
    $region17: #{tpu_custom_call.1} parent=1 // pred_fallthru
      _
    // Predicated region
    $region18: #{tpu_custom_call.1} parent=1 // pred_check
      _
    $region19: #{tpu_custom_call.1} parent=1 // pred_check_branch
      %24 = sbr.rel (0) target = $region21
    $region20: #{tpu_custom_call.1} parent=1 // pred_region
      _
    $region21: #{tpu_custom_call.1} parent=1 // pred_fallthru
      _
    // Predicated region
    $region22: #{tpu_custom_call.1} parent=1 // pred_check
      _
    $region23: #{tpu_custom_call.1} parent=1 // pred_check_branch
      %26 = sbr.rel (0) target = $region25
    $region24: #{tpu_custom_call.1} parent=1 // pred_region
      _
    $region25: #{tpu_custom_call.1} parent=1 // pred_fallthru
      _
    // Predicated region
    $region26: #{tpu_custom_call.1} parent=1 // pred_check
      _
    $region27: #{tpu_custom_call.1} parent=1 // pred_check_branch
      %28 = sbr.rel (0) target = $region29
    $region28: #{tpu_custom_call.1} parent=1 // pred_region
      _
    $region29: #{tpu_custom_call.1} parent=1 // pred_fallthru
      _
    // Predicated region
    $region30: #{tpu_custom_call.1} parent=1 // pred_check
      _
    $region31: #{tpu_custom_call.1} parent=1 // pred_check_branch
      %30 = sbr.rel (0) target = $region33
    $region32: #{tpu_custom_call.1} parent=1 // pred_region
      _
    $region33: #{tpu_custom_call.1} parent=1 // pred_fallthru
      _
    // Predicated region
    $region34: #{tpu_custom_call.1} parent=1 // pred_check
      _
    $region35: #{tpu_custom_call.1} parent=1 // pred_check_branch
      %32 = sbr.rel (0) target = $region37
    $region36: #{tpu_custom_call.1} parent=1 // pred_region
      _
    $region37: #{tpu_custom_call.1} parent=1 // pred_fallthru
      _
    %v33 = vld [vmem:[%s0] sm:$0x3]
    %v34 = vld [vmem:[%s1] sm:$0xff]
    %36 = vset.pattern.permute.xlu0 0
    %37 = vperm.xlu0 %36, %v34
    %v38 = vpop.permute.xlu0 %37
    %v41 = vlaneseq
    %v42 = vshrl.u32 %v41, 7
    %v43 = vsub.s32 0, %v42
    %v44 = vrot.slane %v33, %v43
    %v45 = vlaneseq
    %v46 = vshrl.u32 %v45, 7
    %v47 = vsub.s32 1, %v46
    %v48 = vrot.slane %v33, %v47
    %v51 = vmul.f32 %v38, %v44
    %v52 = vmul.f32 %v38, %v48
    %v53 = vld [vmem:[%s2] sm:$0xff]
    %55 = vset.pattern.permute.xlu0 0
    %56 = vperm.xlu0 %55, %v53
    %v57 = vpop.permute.xlu0 %56
    %v59 = vadd.f32 %v51, %v57
    %v60 = vadd.f32 %v52, %v57
    %v61 = vand.u32 2147483647, %v59
    %vm62 = vcmp.le.f32.partialorder %v61, 0.7853982
    %vm63 = vcmp.lt.s32.totalorder %v59, 0
    %v64 = vand.u32 %v59, 2139095040
    %v65 = vshrl.u32 %v64, 23
    %v66 = vsub.s32 %v65, 127
    %v67 = vand.u32 2147483647, %v59
    %v68 = vand.u32 %v67, 8388607
    %v69 = vor.u32 %v68, 8388608
    %v70 = vsub.s32 0, %v69
    %v71 = vadd.s32 %v66, 1
    %vm72 = vcmp.gt.s32.totalorder %v71, 0
    %v73 = vsel %vm72, %v71, 0
    %v74 = vshrl.u32 %v73, 5
    %v75 = vand.u32 %v73, 31
    %v76 = vsub.s32 32, %v75
    %v77 = vshrl.u32 683565275, %v76
    %v78 = vshll.u32 683565275, %v75
    %v79 = vshrl.u32 2475754826, %v76
    %v80 = vor.u32 %v78, %v79
    %v81 = vshll.u32 2475754826, %v75
    %v82 = vshrl.u32 2131351028, %v76
    %v83 = vor.u32 %v81, %v82
    %v84 = vshll.u32 2131351028, %v75
    %v85 = vshrl.u32 2102212464, %v76
    %v86 = vor.u32 %v84, %v85
    %v87 = vshll.u32 2102212464, %v75
    %v88 = vshrl.u32 920167782, %v76
    %v89 = vor.u32 %v87, %v88
    %v90 = vshll.u32 920167782, %v75
    %v91 = vshrl.u32 1326507024, %v76
    %v92 = vor.u32 %v90, %v91
    %vm93 = vcmp.lt.s32.totalorder %v74, 1
    %vm94 = vcmp.lt.s32.totalorder %v74, 2
    %vm95 = vcmp.lt.s32.totalorder %v74, 3
    %vm96 = vcmp.lt.s32.totalorder %v74, 4
    %v97 = vsel %vm93, %v77, %v80
    %v98 = vsel %vm96, %v86, 2102212464
    %v99 = vsel %vm95, %v83, %v98
    %v100 = vsel %vm94, %v97, %v99
    %v101 = vsel %vm93, %v80, %v83
    %v102 = vsel %vm96, %v89, 920167782
    %v103 = vsel %vm95, %v86, %v102
    %v104 = vsel %vm94, %v101, %v103
    %v105 = vsel %vm93, %v83, %v86
    %v106 = vsel %vm96, %v92, 1326507024
    %v107 = vsel %vm95, %v89, %v106
    %v108 = vsel %vm94, %v105, %v107
    %v109 = vshll.u32 %v69, 8
    %v110 = vmul.u32.u64.compose %v109, %v108
    %v111 = vextract.low.u32 %v110
    %v112 = vextract.high.u32 %v110
    %v113 = vmul.u32.u64.compose %v109, %v104
    %v114 = vextract.low.u32 %v113
    %v115 = vextract.high.u32 %v113
    %v116 = vmul.u32 %v109, %v100
    %v117 = vadd.s32 %v112, %v114
    %vm118 = vc.u32 %v112, %v114
    %v119 = vadd.s32 %v115, 1
    %v120 = vsel %vm118, %v119, %v115
    %v121 = vadd.s32 %v116, %v120
    %v122 = vadd.s32 %v121, 536870912
    %v123 = vshrl.u32 %v122, 30
    %v124 = vshll.u32 %v123, 30
    %v125 = vsub.s32 %v121, %v124
    %vm126 = vcmp.lt.s32.totalorder %v125, 0
    %v127 = vsub.s32 0, %v125
    %v128 = vsel %vm126, %v127, %v125
    %v129 = vclz %v128
    %v130 = vsub.s32 %v129, 2
    %vm131 = vcmp.gt.s32.totalorder 0, %v130
    %v132 = vsel %vm131, 0, %v130
    %v133 = vsub.s32 32, %v132
    %v134 = vshll.u32 %v125, %v132
    %v135 = vshrl.u32 %v117, %v133
    %v136 = vor.u32 %v134, %v135
    %v137 = vsub.s32 4294967266, %v132
    %v138 = vadd.s32 %v137, 127
    %v139 = vshll.u32 %v138, 23
    %v140 = vor.u32 4788187, %v139
    %v141 = vand.u32 2147483647, %v140
    %v143 = vcvt.s32.f32 %v136
    %v144 = vmul.f32 %v143, %v141
    %v145 = vxor.u32 %v144, 2147483648
    %v146 = vsel %vm63, %v145, %v144
    %v147 = vsub.s32 4, %v123
    %v148 = vsel %vm63, %v147, %v123
    %v149 = vsel %vm62, %v59, %v146
    %v150 = vsel %vm62, 0, %v148
    %v151 = vcosq.f32.pop %v149
    %v152 = vsinq.f32.pop %v149
    %vm153 = vweird.f32 %v59
    %v154 = vadd.s32 %v150, 3
    %v155 = vand.u32 %v154, 3
    %vm156 = vcmp.lt.s32.totalorder %v155, 2
    %vm157 = vcmp.eq.s32.totalorder %v155, 0
    %v158 = vxor.u32 %v152, 2147483648
    %v159 = vsel %vm157, %v151, %v158
    %vm160 = vcmp.eq.s32.totalorder %v155, 2
    %v161 = vxor.u32 %v151, 2147483648
    %v162 = vsel %vm160, %v161, %v152
    %v163 = vsel %vm156, %v159, %v162
    %v164 = vsel %vm153, nan, %v163
    %v165 = vand.u32 2147483647, %v60
    %vm166 = vcmp.le.f32.partialorder %v165, 0.7853982
    %vm167 = vcmp.lt.s32.totalorder %v60, 0
    %v168 = vand.u32 %v60, 2139095040
    %v169 = vshrl.u32 %v168, 23
    %v170 = vsub.s32 %v169, 127
    %v171 = vand.u32 2147483647, %v60
    %v172 = vand.u32 %v171, 8388607
    %v173 = vor.u32 %v172, 8388608
    %v174 = vsub.s32 0, %v173
    %v175 = vadd.s32 %v170, 1
    %vm176 = vcmp.gt.s32.totalorder %v175, 0
    %v177 = vsel %vm176, %v175, 0
    %v178 = vshrl.u32 %v177, 5
    %v179 = vand.u32 %v177, 31
    %v180 = vsub.s32 32, %v179
    %v181 = vshrl.u32 683565275, %v180
    %v182 = vshll.u32 683565275, %v179
    %v183 = vshrl.u32 2475754826, %v180
    %v184 = vor.u32 %v182, %v183
    %v185 = vshll.u32 2475754826, %v179
    %v186 = vshrl.u32 2131351028, %v180
    %v187 = vor.u32 %v185, %v186
    %v188 = vshll.u32 2131351028, %v179
    %v189 = vshrl.u32 2102212464, %v180
    %v190 = vor.u32 %v188, %v189
    %v191 = vshll.u32 2102212464, %v179
    %v192 = vshrl.u32 920167782, %v180
    %v193 = vor.u32 %v191, %v192
    %v194 = vshll.u32 920167782, %v179
    %v195 = vshrl.u32 1326507024, %v180
    %v196 = vor.u32 %v194, %v195
    %vm197 = vcmp.lt.s32.totalorder %v178, 1
    %vm198 = vcmp.lt.s32.totalorder %v178, 2
    %vm199 = vcmp.lt.s32.totalorder %v178, 3
    %vm200 = vcmp.lt.s32.totalorder %v178, 4
    %v201 = vsel %vm197, %v181, %v184
    %v202 = vsel %vm200, %v190, 2102212464
    %v203 = vsel %vm199, %v187, %v202
    %v204 = vsel %vm198, %v201, %v203
    %v205 = vsel %vm197, %v184, %v187
    %v206 = vsel %vm200, %v193, 920167782
    %v207 = vsel %vm199, %v190, %v206
    %v208 = vsel %vm198, %v205, %v207
    %v209 = vsel %vm197, %v187, %v190
    %v210 = vsel %vm200, %v196, 1326507024
    %v211 = vsel %vm199, %v193, %v210
    %v212 = vsel %vm198, %v209, %v211
    %v213 = vshll.u32 %v173, 8
    %v214 = vmul.u32.u64.compose %v213, %v212
    %v215 = vextract.low.u32 %v214
    %v216 = vextract.high.u32 %v214
    %v217 = vmul.u32.u64.compose %v213, %v208
    %v218 = vextract.low.u32 %v217
    %v219 = vextract.high.u32 %v217
    %v220 = vmul.u32 %v213, %v204
    %v221 = vadd.s32 %v216, %v218
    %vm222 = vc.u32 %v216, %v218
    %v223 = vadd.s32 %v219, 1
    %v224 = vsel %vm222, %v223, %v219
    %v225 = vadd.s32 %v220, %v224
    %v226 = vadd.s32 %v225, 536870912
    %v227 = vshrl.u32 %v226, 30
    %v228 = vshll.u32 %v227, 30
    %v229 = vsub.s32 %v225, %v228
    %vm230 = vcmp.lt.s32.totalorder %v229, 0
    %v231 = vsub.s32 0, %v229
    %v232 = vsel %vm230, %v231, %v229
    %v233 = vclz %v232
    %v234 = vsub.s32 %v233, 2
    %vm235 = vcmp.gt.s32.totalorder 0, %v234
    %v236 = vsel %vm235, 0, %v234
    %v237 = vsub.s32 32, %v236
    %v238 = vshll.u32 %v229, %v236
    %v239 = vshrl.u32 %v221, %v237
    %v240 = vor.u32 %v238, %v239
    %v241 = vsub.s32 4294967266, %v236
    %v242 = vadd.s32 %v241, 127
    %v243 = vshll.u32 %v242, 23
    %v244 = vor.u32 4788187, %v243
    %v245 = vand.u32 2147483647, %v244
    %v247 = vcvt.s32.f32 %v240
    %v248 = vmul.f32 %v247, %v245
    %v249 = vxor.u32 %v248, 2147483648
    %v250 = vsel %vm167, %v249, %v248
    %v251 = vsub.s32 4, %v227
    %v252 = vsel %vm167, %v251, %v227
    %v253 = vsel %vm166, %v60, %v250
    %v254 = vsel %vm166, 0, %v252
    %v255 = vcosq.f32.pop %v253
    %v256 = vsinq.f32.pop %v253
    %vm257 = vweird.f32 %v60
    %v258 = vadd.s32 %v254, 3
    %v259 = vand.u32 %v258, 3
    %vm260 = vcmp.lt.s32.totalorder %v259, 2
    %vm261 = vcmp.eq.s32.totalorder %v259, 0
    %v262 = vxor.u32 %v256, 2147483648
    %v263 = vsel %vm261, %v255, %v262
    %vm264 = vcmp.eq.s32.totalorder %v259, 2
    %v265 = vxor.u32 %v255, 2147483648
    %v266 = vsel %vm264, %v265, %v256
    %v267 = vsel %vm260, %v263, %v266
    %v268 = vsel %vm257, nan, %v267
    %v269 = vld [vmem:[%s3] sm:$0xff]
    %v270 = vld [vmem:[%s3 + $0x8] sm:$0xff]
    %v271 = vld [vmem:[%s3 + $0x10] sm:$0xff]
    %v272 = vld [vmem:[%s3 + $0x18] sm:$0xff]
    %v273 = vld [vmem:[%s6] sm:$0xff]
    %v274 = vld [vmem:[%s6 + $0x8] sm:$0xff]
    %v275 = vld [vmem:[%s6 + $0x10] sm:$0xff]
    %v276 = vld [vmem:[%s6 + $0x18] sm:$0xff]
    %278 = vset.pattern.permute.xlu0 0
    %279 = vperm.xlu0 %278, %v273
    %v280 = vpop.permute.xlu0 %279
    %283 = vset.pattern.permute.xlu0 0
    %284 = vperm.xlu0 %283, %v274
    %v285 = vpop.permute.xlu0 %284
    %288 = vset.pattern.permute.xlu0 0
    %289 = vperm.xlu0 %288, %v275
    %v290 = vpop.permute.xlu0 %289
    %293 = vset.pattern.permute.xlu0 0
    %294 = vperm.xlu0 %293, %v276
    %v295 = vpop.permute.xlu0 %294
    %vm297 = vcmask 64512
    %v299 = vsel %vm297, %v269, 0
    %v302 = vsel %vm297, %v270, 0
    %v305 = vsel %vm297, %v271, 0
    %v308 = vsel %vm297, %v272, 0
    %310 = vmatprep.subr.mxu0 0.0
    %311 = vmatpush1.msra.mxu0 0.0
    %312 = vmatprep.subr.mxu0 0.0
    %313 = vmatpush1.msra.mxu0 0.0
    %314 = vmatprep.subr.mxu0 0.0
    %315 = vmatpush1.msra.mxu0 0.0
    %316 = vmatprep.subr.mxu0 0.0
    %317 = vmatpush1.msra.mxu0 0.0
    %318 = vmatprep.subr.mxu0 0.0
    %319 = vmatpush1.msra.mxu0 0.0
    %320 = vmatprep.subr.mxu0 0.0
    %321 = vmatpush1.msra.mxu0 0.0
    %322 = vmatprep.subr.mxu0 0.0
    %323 = vmatpush1.msra.mxu0 0.0
    %324 = vmatprep.subr.mxu0 0.0
    %325 = vmatpush1.msra.mxu0 0.0
    %326 = vmatprep.subr.mxu0 0.0
    %327 = vmatpush1.msra.mxu0 0.0
    %328 = vmatprep.subr.mxu0 0.0
    %329 = vmatpush1.msra.mxu0 0.0
    %330 = vmatprep.subr.mxu0 0.0
    %331 = vmatpush1.msra.mxu0 0.0
    %332 = vmatprep.subr.mxu0 0.0
    %333 = vmatpush1.msra.mxu0 0.0
    %334 = vmatprep.subr.mxu0 0.0
    %335 = vmatpush1.msra.mxu0 0.0
    %336 = vmatprep.subr.mxu0 0.0
    %337 = vmatpush1.msra.mxu0 0.0
    %338 = vmatprep.subr.mxu0 0.0
    %339 = vmatpush1.msra.mxu0 0.0
    %340 = vmatprep.subr.mxu0 %v268
    %341 = vmatpush1.msra.mxu0 %v164
    %342 = vmatprep.subr.mxu0 0.0
    %343 = vmatpush2.msra.mxu0 0.0
    %344 = vmatprep.subr.mxu0 0.0
    %345 = vmatpush2.msra.mxu0 0.0
    %346 = vmatprep.subr.mxu0 0.0
    %347 = vmatpush2.msra.mxu0 0.0
    %348 = vmatprep.subr.mxu0 0.0
    %349 = vmatpush2.msra.mxu0 0.0
    %350 = vmatprep.subr.mxu0 0.0
    %351 = vmatpush2.msra.mxu0 0.0
    %352 = vmatprep.subr.mxu0 0.0
    %353 = vmatpush2.msra.mxu0 0.0
    %354 = vmatprep.subr.mxu0 0.0
    %355 = vmatpush2.msra.mxu0 0.0
    %356 = vmatprep.subr.mxu0 0.0
    %357 = vmatpush2.msra.mxu0 0.0
    %358 = vmatprep.subr.mxu0 0.0
    %359 = vmatpush2.msra.mxu0 0.0
    %360 = vmatprep.subr.mxu0 0.0
    %361 = vmatpush2.msra.mxu0 0.0
    %362 = vmatprep.subr.mxu0 0.0
    %363 = vmatpush2.msra.mxu0 0.0
    %364 = vmatprep.subr.mxu0 0.0
    %365 = vmatpush2.msra.mxu0 0.0
    %366 = vmatprep.subr.mxu0 0.0
    %367 = vmatpush2.msra.mxu0 0.0
    %368 = vmatprep.subr.mxu0 0.0
    %369 = vmatpush2.msra.mxu0 0.0
    %370 = vmatprep.subr.mxu0 0.0
    %371 = vmatpush2.msra.mxu0 0.0
    %372 = vmatprep.subr.mxu0 0.0
    %373 = vmatpush2.msra.mxu0 0.0
    %374 = vmatprep.mubr.f32.mxu0 0.0
    %375 = vmatmul.mubr.f32.gmra.mxu0 %v299
    %v376 = vpop.f32.mrf.mxu0
    %v377 = vadd.f32 %v280, %v376
    %v378 = vpop.f32.mrf.mxu0
    %v379 = vadd.f32 %v280, %v378
    %380 = vmatprep.mubr.f32.mxu0 0.0
    %381 = vmatmul.mubr.f32.gmra.mxu0 %v302
    %v382 = vpop.f32.mrf.mxu0
    %v383 = vadd.f32 %v285, %v382
    %v384 = vpop.f32.mrf.mxu0
    %v385 = vadd.f32 %v285, %v384
    %386 = vmatprep.mubr.f32.mxu0 0.0
    %387 = vmatmul.mubr.f32.gmra.mxu0 %v305
    %v388 = vpop.f32.mrf.mxu0
    %v389 = vadd.f32 %v290, %v388
    %v390 = vpop.f32.mrf.mxu0
    %v391 = vadd.f32 %v290, %v390
    %392 = vmatprep.mubr.f32.mxu0 0.0
    %393 = vmatmul.mubr.f32.gmra.mxu0 %v308
    %v394 = vpop.f32.mrf.mxu0
    %v395 = vadd.f32 %v295, %v394
    %v396 = vpop.f32.mrf.mxu0
    %v397 = vadd.f32 %v295, %v396
    %398 = vdwg.mxu0
    %v399 = vtanh.pop %v377
    %v400 = vtanh.pop %v379
    %v401 = vtanh.pop %v383
    %v402 = vtanh.pop %v385
    %v403 = vtanh.pop %v389
    %v404 = vtanh.pop %v391
    %v405 = vtanh.pop %v395
    %v406 = vtanh.pop %v397
    %v407 = vld [vmem:[%s4] sm:$0xff]
    %v408 = vld [vmem:[%s4 + $0x8] sm:$0xff]
    %v409 = vld [vmem:[%s4 + $0x10] sm:$0xff]
    %v410 = vld [vmem:[%s4 + $0x18] sm:$0xff]
    %v411 = vld [vmem:[%s7] sm:$0xff]
    %v412 = vld [vmem:[%s7 + $0x8] sm:$0xff]
    %v413 = vld [vmem:[%s7 + $0x10] sm:$0xff]
    %v414 = vld [vmem:[%s7 + $0x18] sm:$0xff]
    %416 = vset.pattern.permute.xlu0 0
    %417 = vperm.xlu0 %416, %v411
    %v418 = vpop.permute.xlu0 %417
    %421 = vset.pattern.permute.xlu0 0
    %422 = vperm.xlu0 %421, %v412
    %v423 = vpop.permute.xlu0 %422
    %426 = vset.pattern.permute.xlu0 0
    %427 = vperm.xlu0 %426, %v413
    %v428 = vpop.permute.xlu0 %427
    %431 = vset.pattern.permute.xlu0 0
    %432 = vperm.xlu0 %431, %v414
    %v433 = vpop.permute.xlu0 %432
    %vm435 = vcmask 261120
    %v437 = vsel %vm435, %v407, 0
    %v440 = vsel %vm435, %v408, 0
    %v443 = vsel %vm435, %v409, 0
    %v446 = vsel %vm435, %v410, 0
    %448 = vmatprep.subr.mxu0 0.0
    %449 = vmatpush1.msra.mxu0 0.0
    %450 = vmatprep.subr.mxu0 0.0
    %451 = vmatpush1.msra.mxu0 0.0
    %452 = vmatprep.subr.mxu0 0.0
    %453 = vmatpush1.msra.mxu0 0.0
    %454 = vmatprep.subr.mxu0 0.0
    %455 = vmatpush1.msra.mxu0 0.0
    %456 = vmatprep.subr.mxu0 0.0
    %457 = vmatpush1.msra.mxu0 0.0
    %458 = vmatprep.subr.mxu0 0.0
    %459 = vmatpush1.msra.mxu0 0.0
    %460 = vmatprep.subr.mxu0 0.0
    %461 = vmatpush1.msra.mxu0 0.0
    %462 = vmatprep.subr.mxu0 0.0
    %463 = vmatpush1.msra.mxu0 0.0
    %464 = vmatprep.subr.mxu0 0.0
    %465 = vmatpush1.msra.mxu0 0.0
    %466 = vmatprep.subr.mxu0 0.0
    %467 = vmatpush1.msra.mxu0 0.0
    %468 = vmatprep.subr.mxu0 0.0
    %469 = vmatpush1.msra.mxu0 0.0
    %470 = vmatprep.subr.mxu0 0.0
    %471 = vmatpush1.msra.mxu0 0.0
    %472 = vmatprep.subr.mxu0 %v406
    %473 = vmatpush1.msra.mxu0 %v405
    %474 = vmatprep.subr.mxu0 %v404
    %475 = vmatpush1.msra.mxu0 %v403
    %476 = vmatprep.subr.mxu0 %v402
    %477 = vmatpush1.msra.mxu0 %v401
    %478 = vmatprep.subr.mxu0 %v400
    %479 = vmatpush1.msra.mxu0 %v399
    %480 = vmatprep.subr.mxu0 0.0
    %481 = vmatpush2.msra.mxu0 0.0
    %482 = vmatprep.subr.mxu0 0.0
    %483 = vmatpush2.msra.mxu0 0.0
    %484 = vmatprep.subr.mxu0 0.0
    %485 = vmatpush2.msra.mxu0 0.0
    %486 = vmatprep.subr.mxu0 0.0
    %487 = vmatpush2.msra.mxu0 0.0
    %488 = vmatprep.subr.mxu0 0.0
    %489 = vmatpush2.msra.mxu0 0.0
    %490 = vmatprep.subr.mxu0 0.0
    %491 = vmatpush2.msra.mxu0 0.0
    %492 = vmatprep.subr.mxu0 0.0
    %493 = vmatpush2.msra.mxu0 0.0
    %494 = vmatprep.subr.mxu0 0.0
    %495 = vmatpush2.msra.mxu0 0.0
    %496 = vmatprep.subr.mxu0 0.0
    %497 = vmatpush2.msra.mxu0 0.0
    %498 = vmatprep.subr.mxu0 0.0
    %499 = vmatpush2.msra.mxu0 0.0
    %500 = vmatprep.subr.mxu0 0.0
    %501 = vmatpush2.msra.mxu0 0.0
    %502 = vmatprep.subr.mxu0 0.0
    %503 = vmatpush2.msra.mxu0 0.0
    %504 = vmatprep.subr.mxu0 0.0
    %505 = vmatpush2.msra.mxu0 0.0
    %506 = vmatprep.subr.mxu0 0.0
    %507 = vmatpush2.msra.mxu0 0.0
    %508 = vmatprep.subr.mxu0 0.0
    %509 = vmatpush2.msra.mxu0 0.0
    %510 = vmatprep.subr.mxu0 0.0
    %511 = vmatpush2.msra.mxu0 0.0
    %512 = vmatprep.mubr.f32.mxu0 0.0
    %513 = vmatmul.mubr.f32.gmra.mxu0 %v437
    %v514 = vpop.f32.mrf.mxu0
    %v515 = vadd.f32 %v418, %v514
    %v516 = vpop.f32.mrf.mxu0
    %v517 = vadd.f32 %v418, %v516
    %518 = vmatprep.mubr.f32.mxu0 0.0
    %519 = vmatmul.mubr.f32.gmra.mxu0 %v440
    %v520 = vpop.f32.mrf.mxu0
    %v521 = vadd.f32 %v423, %v520
    %v522 = vpop.f32.mrf.mxu0
    %v523 = vadd.f32 %v423, %v522
    %524 = vmatprep.mubr.f32.mxu0 0.0
    %525 = vmatmul.mubr.f32.gmra.mxu0 %v443
    %v526 = vpop.f32.mrf.mxu0
    %v527 = vadd.f32 %v428, %v526
    %v528 = vpop.f32.mrf.mxu0
    %v529 = vadd.f32 %v428, %v528
    %530 = vmatprep.mubr.f32.mxu0 0.0
    %531 = vmatmul.mubr.f32.gmra.mxu0 %v446
    %v532 = vpop.f32.mrf.mxu0
    %v533 = vadd.f32 %v433, %v532
    %v534 = vpop.f32.mrf.mxu0
    %v535 = vadd.f32 %v433, %v534
    %536 = vdwg.mxu0
    %v537 = vtanh.pop %v515
    %v538 = vtanh.pop %v517
    %v539 = vtanh.pop %v521
    %v540 = vtanh.pop %v523
    %v541 = vtanh.pop %v527
    %v542 = vtanh.pop %v529
    %v543 = vtanh.pop %v533
    %v544 = vtanh.pop %v535
    %v545 = vld [vmem:[%s5] sm:$0xf]
    %v546 = vld [vmem:[%s8] sm:$0xf]
    %548 = vset.pattern.permute.xlu0 0
    %549 = vperm.xlu0 %548, %v546
    %v550 = vpop.permute.xlu0 %549
    %v553 = vsel %vm435, %v545, 0
    %555 = vmatprep.subr.mxu0 0.0
    %556 = vmatpush1.msra.mxu0 0.0
    %557 = vmatprep.subr.mxu0 0.0
    %558 = vmatpush1.msra.mxu0 0.0
    %559 = vmatprep.subr.mxu0 0.0
    %560 = vmatpush1.msra.mxu0 0.0
    %561 = vmatprep.subr.mxu0 0.0
    %562 = vmatpush1.msra.mxu0 0.0
    %563 = vmatprep.subr.mxu0 0.0
    %564 = vmatpush1.msra.mxu0 0.0
    %565 = vmatprep.subr.mxu0 0.0
    %566 = vmatpush1.msra.mxu0 0.0
    %567 = vmatprep.subr.mxu0 0.0
    %568 = vmatpush1.msra.mxu0 0.0
    %569 = vmatprep.subr.mxu0 0.0
    %570 = vmatpush1.msra.mxu0 0.0
    %571 = vmatprep.subr.mxu0 0.0
    %572 = vmatpush1.msra.mxu0 0.0
    %573 = vmatprep.subr.mxu0 0.0
    %574 = vmatpush1.msra.mxu0 0.0
    %575 = vmatprep.subr.mxu0 0.0
    %576 = vmatpush1.msra.mxu0 0.0
    %577 = vmatprep.subr.mxu0 0.0
    %578 = vmatpush1.msra.mxu0 0.0
    %579 = vmatprep.subr.mxu0 %v544
    %580 = vmatpush1.msra.mxu0 %v543
    %581 = vmatprep.subr.mxu0 %v542
    %582 = vmatpush1.msra.mxu0 %v541
    %583 = vmatprep.subr.mxu0 %v540
    %584 = vmatpush1.msra.mxu0 %v539
    %585 = vmatprep.subr.mxu0 %v538
    %586 = vmatpush1.msra.mxu0 %v537
    %587 = vmatprep.subr.mxu0 0.0
    %588 = vmatpush2.msra.mxu0 0.0
    %589 = vmatprep.subr.mxu0 0.0
    %590 = vmatpush2.msra.mxu0 0.0
    %591 = vmatprep.subr.mxu0 0.0
    %592 = vmatpush2.msra.mxu0 0.0
    %593 = vmatprep.subr.mxu0 0.0
    %594 = vmatpush2.msra.mxu0 0.0
    %595 = vmatprep.subr.mxu0 0.0
    %596 = vmatpush2.msra.mxu0 0.0
    %597 = vmatprep.subr.mxu0 0.0
    %598 = vmatpush2.msra.mxu0 0.0
    %599 = vmatprep.subr.mxu0 0.0
    %600 = vmatpush2.msra.mxu0 0.0
    %601 = vmatprep.subr.mxu0 0.0
    %602 = vmatpush2.msra.mxu0 0.0
    %603 = vmatprep.subr.mxu0 0.0
    %604 = vmatpush2.msra.mxu0 0.0
    %605 = vmatprep.subr.mxu0 0.0
    %606 = vmatpush2.msra.mxu0 0.0
    %607 = vmatprep.subr.mxu0 0.0
    %608 = vmatpush2.msra.mxu0 0.0
    %609 = vmatprep.subr.mxu0 0.0
    %610 = vmatpush2.msra.mxu0 0.0
    %611 = vmatprep.subr.mxu0 0.0
    %612 = vmatpush2.msra.mxu0 0.0
    %613 = vmatprep.subr.mxu0 0.0
    %614 = vmatpush2.msra.mxu0 0.0
    %615 = vmatprep.subr.mxu0 0.0
    %616 = vmatpush2.msra.mxu0 0.0
    %617 = vmatprep.subr.mxu0 0.0
    %618 = vmatpush2.msra.mxu0 0.0
    %619 = vmatprep.mubr.f32.mxu0 0.0
    %620 = vmatmul.mubr.f32.gmra.mxu0 %v553
    %v621 = vpop.f32.mrf.mxu0
    %v622 = vadd.f32 %v550, %v621
    %v623 = vpop.f32.mrf.mxu0
    %v624 = vadd.f32 %v550, %v623
    %625 = vdwg.mxu0
    %v626 = vmul.f32 %v622, %v164
    %v627 = vmul.f32 %v624, %v268
    %v630 = vrot.slane %v626, 1
    %v631 = vrot.slane %v627, 1
    %v634 = vadd.f32 %v626, %v630
    %v635 = vadd.f32 %v627, %v631
    %v636 = vrot.slane %v626, 2
    %v637 = vrot.slane %v627, 2
    %v640 = vadd.f32 %v634, %v636
    %v641 = vadd.f32 %v635, %v637
    %v642 = vrot.slane %v626, 3
    %v643 = vrot.slane %v627, 3
    %v646 = vadd.f32 %v640, %v642
    %v647 = vadd.f32 %v641, %v643
    %v650 = vcombine.low %v646, %v647
    %v652 = vunpack.c.l.s4 1966171168
    %v653 = vunpack.c.0.s8 %v652
    %v654 = vlaneseq
    %v655 = vshrl.u32 %v654, 7
    %v656 = vsub.s32 %v653, %v655
    %v657 = vrot.slane %v650, %v656
    %v659 = vunpack.c.l.s4 1966171168
    %v660 = vunpack.c.0.s8 %v659
    %v661 = vlaneseq
    %v662 = vshrl.u32 %v661, 7
    %v663 = vsub.s32 %v660, %v662
    %v664 = vrot.slane %v657, %v663
    %v666 = vlaneseq
    %vm667 = vcmp.ge.s32.totalorder %v666, 0
    %vm668 = vcmp.lt.s32.totalorder %v666, 256
    %vm669 = vmand %vm667, %vm668
    %670 = vst.msk [vmem:[#allocation2] sm:$0x3] %vm669, %v664
    // Predicated region
    $region38: #{tpu_custom_call.1} parent=1 // pred_check
      _
    $region39: #{tpu_custom_call.1} parent=1 // pred_check_branch
      %672 = sbr.rel (0) target = $region41
    $region40: #{tpu_custom_call.1} parent=1 // pred_region
      %s674 = ssub.s32 32, 32
      %675 = vsyncadd [#allocation3], %s674
      %s677 = sshll.u32 [#allocation2], 4
      %s678 = int_to_ptr.vmem [resolvable:$true] %s677
      %680 = dma.vmem_to_hbm [thread:$0]  %s678, 32, %s9, [#allocation3]
    $region41: #{tpu_custom_call.1} parent=1 // pred_fallthru
      _
    // Predicated region
    $region42: #{tpu_custom_call.1} parent=1 // pred_check
      _
    $region43: #{tpu_custom_call.1} parent=1 // pred_check_branch
      %682 = sbr.rel (0) target = $region45
    $region44: #{tpu_custom_call.1} parent=1 // pred_region
      %683 = dma.done [#allocation3], 32
    $region45: #{tpu_custom_call.1} parent=1 // pred_fallthru
      _
    %684 = vsyncpa [#allocation3], 1

</llo_original>
